<compile_context>
chip_gen: v7x
topology: tpu7x:2x2x1
jax: 0.10.0
libtpu: 0.0.40
codegen_flags: <defaults>
</compile_context>

<pallas_src>
import jax
import jax.numpy as jnp
import numpy as np
from jax.experimental import pallas as pl
from jax.experimental.pallas import tpu as pltpu


def _multi_gcn_kernel(m_ref, x_ref, b_ref, o_ref):
    # m_ref: (Cout*N, C*N)  bf16  fused weight*propagation matrix (batch-invariant)
    # x_ref: (C*N,   Lt)    f32   lane-tile of channel*node-flattened input (B folded in lanes)
    # b_ref: (Cout*N, 1)    f32   bias replicated per node row
    # o_ref: (Cout*N, Lt)   f32
    acc = jnp.dot(m_ref[...], x_ref[...].astype(jnp.bfloat16),
                  preferred_element_type=jnp.float32)        # f32 MXU accumulation
    o_ref[...] = (acc + b_ref[...]).astype(o_ref.dtype)


def multi_gcn_forward(x, supports, weight, bias, order=2):
    """Forward pass of multi_gcn (inference; dropout is identity).

    x       : (B, C, N, L) float32   (NCHW: batch, channels, nodes, length)
    supports: list of (N, N) float32 adjacency matrices
    weight  : (C_out, T*C) float32, T = order*len(supports) + 1
              (Conv2d 1x1 weight, channel index m = t*C + c from torch.cat)
    bias    : (C_out,) float32
    returns : (B, C_out, N, L) float32
    """
    B, C, N, L = x.shape
    Cout = weight.shape[0]
    T = order * len(supports) + 1
    assert weight.shape == (Cout, T * C)

    # ---- glue: propagation matrices exactly as the PyTorch loop builds them ----
    # nconv(x, a): x1[..., w, l] = sum_v a[w, v] * x[..., v, l]  (left-mult by a)
    mats = [jnp.eye(N, dtype=jnp.float32)]          # the raw `x` term
    for a in supports:
        p = a
        mats.append(p)                              # a^1
        for _ in range(2, order + 1):
            p = jnp.matmul(a, p)                    # a^k
            mats.append(p)
    P = jnp.stack(mats, axis=0)                     # (T, N, N)

    # ---- glue: fuse 1x1-conv weight with P, pre-cast to bf16 once ----
    # torch.cat(out, dim=1) gives channel index m = t*C + c.
    W_r = weight.reshape(Cout, T, C)                                    # (Cout, T, C)
    M = jnp.einsum('otc,tqv->oqcv', W_r, P).reshape(Cout * N, C * N)
    M = M.astype(jnp.bfloat16)                                          # batch-invariant

    # ---- fold batch into the lane dimension: x_flat[c*N+v, b*L+l] = x[b,c,v,l] ----
    x_flat = jnp.transpose(x, (1, 2, 0, 3)).reshape(C * N, B * L)
    bias_rows = jnp.repeat(bias, N).reshape(Cout * N, 1).astype(jnp.float32)

    BL = B * L
    n_lane_tiles = 2 if (BL % 256 == 0) else 1       # keep both v7x TCs busy when possible
    Lt = BL // n_lane_tiles

    cost = pl.CostEstimate(
        flops=2 * (Cout * N) * (C * N) * BL,
        transcendentals=0,
        bytes_accessed=(M.size * 2 + x_flat.size * 4
                        + bias_rows.size * 4 + (Cout * N) * BL * 4),
    )

    out_flat = pl.pallas_call(
        _multi_gcn_kernel,
        out_shape=jax.ShapeDtypeStruct((Cout * N, BL), jnp.float32),
        grid_spec=pltpu.PrefetchScalarGridSpec(
            num_scalar_prefetch=0,
            grid=(n_lane_tiles,),
            in_specs=[
                pl.BlockSpec((Cout * N, C * N), lambda j: (0, 0)),   # fused weights (resident)
                pl.BlockSpec((C * N, Lt), lambda j: (0, j)),         # lane tile of x
                pl.BlockSpec((Cout * N, 1), lambda j: (0, 0)),       # bias rows
            ],
            out_specs=pl.BlockSpec((Cout * N, Lt), lambda j: (0, j)),
        ),
        compiler_params=pltpu.CompilerParams(
            dimension_semantics=("parallel",)),
        cost_estimate=cost,
    )(M, x_flat, bias_rows)

    # (Cout*N, B*L) -> (B, Cout, N, L)
    return jnp.transpose(out_flat.reshape(Cout, N, B, L), (2, 0, 1, 3))


def _reference(x, supports, weight, bias, order=2):
    """Plain-JAX mirror of the PyTorch multi_gcn.forward (dropout = identity)."""
    out = [x]
    for a in supports:
        # nconv: A = a.T ; einsum('ncvl,vw->ncwl', x, A) == einsum('bcvl,wv->bcwl', x, a)
        x1 = jnp.einsum('bcvl,wv->bcwl', x, a)
        out.append(x1)
        for _ in range(2, order + 1):
            x2 = jnp.einsum('bcvl,wv->bcwl', x1, a)
            out.append(x2)
            x1 = x2
    h = jnp.concatenate(out, axis=1)                        # (B, T*C, N, L)
    h = jnp.einsum('om,bmql->boql', weight, h) + bias[None, :, None, None]
    return h


if __name__ == "__main__":
    B, C, N, L = 2, 4, 8, 128
    support_len, order = 3, 2
    Cout = 8
    T = order * support_len + 1                     # 7

    key = jax.random.PRNGKey(0)
    keys = jax.random.split(key, 3 + support_len)
    x = jax.random.normal(keys[0], (B, C, N, L), jnp.float32)

    supports = []
    for s in range(support_len):
        a = jax.random.uniform(keys[3 + s], (N, N), jnp.float32)
        a = a / jnp.sum(a, axis=-1, keepdims=True)  # row-normalized adjacency
        supports.append(a)

    # deterministic "Conv2d(T*C, Cout, 1, 1)" parameters (synthetic init)
    weight = 0.1 * jax.random.normal(keys[1], (Cout, T * C), jnp.float32)
    bias = 0.1 * jax.random.normal(keys[2], (Cout,), jnp.float32)

    out = multi_gcn_forward(x, supports, weight, bias, order=order)
    out = jax.block_until_ready(out)

    ref = _reference(x, supports, weight, bias, order=order)
    assert out.shape == (B, Cout, N, L)
    np.testing.assert_allclose(np.asarray(out), np.asarray(ref), rtol=2e-2, atol=2e-2)
    print("KERNEL_OK")
</pallas_src>

<mosaic_0001>
module attributes {stable_mosaic.version = 11 : i64} {
  func.func @_multi_gcn_kernel(%arg0: i32, %arg1: memref<64x32xbf16, #tpu.memory_space<vmem>>, %arg2: memref<32x128xf32, #tpu.memory_space<vmem>>, %arg3: memref<64x1xf32, #tpu.memory_space<vmem>>, %arg4: memref<64x128xf32, #tpu.memory_space<vmem>>) attributes {dimension_semantics = [#tpu.dimension_semantics<parallel>], iteration_bounds = array<i64: 2>, scalar_prefetch = 0 : i64, scratch_operands = 0 : i64, tpu.core_type = #tpu.core_type<tc>, window_params = [{pipeline_mode = #tpu.pipeline_mode<synchronous>, transform_indices = @transform_0, window_bounds = array<i64: 64, 32>}, {transform_indices = @transform_1, window_bounds = array<i64: 32, 128>}, {pipeline_mode = #tpu.pipeline_mode<synchronous>, transform_indices = @transform_2, window_bounds = array<i64: 64, 1>}, {transform_indices = @transform_3, window_bounds = array<i64: 64, 128>}]} {
    %c0 = arith.constant 0 : index
    %c0_0 = arith.constant 0 : index
    %0 = vector.load %arg1[%c0, %c0_0] : memref<64x32xbf16, #tpu.memory_space<vmem>>, vector<64x32xbf16>
    %c0_1 = arith.constant 0 : index
    %c0_2 = arith.constant 0 : index
    %1 = vector.load %arg2[%c0_1, %c0_2] : memref<32x128xf32, #tpu.memory_space<vmem>>, vector<32x128xf32>
    %2 = arith.truncf %1 : vector<32x128xf32> to vector<32x128xbf16>
    %cst = arith.constant dense<0.000000e+00> : vector<64x128xf32>
    %3 = tpu.matmul %0, %2, %cst {dimension_numbers = #tpu.dot_dimension_numbers<[1], [0], [0], [1], [0, 0, 1, 1], [], []>} : vector<64x32xbf16>, vector<32x128xbf16>, vector<64x128xf32> -> vector<64x128xf32>
    %c0_3 = arith.constant 0 : index
    %c0_4 = arith.constant 0 : index
    %4 = vector.load %arg3[%c0_3, %c0_4] : memref<64x1xf32, #tpu.memory_space<vmem>>, vector<64x1xf32>
    %5 = vector.broadcast %4 : vector<64x1xf32> to vector<64x128xf32>
    %6 = arith.addf %3, %5 : vector<64x128xf32>
    %c0_5 = arith.constant 0 : index
    %c0_6 = arith.constant 0 : index
    %7 = vector.load %arg4[%c0_5, %c0_6] : memref<64x128xf32, #tpu.memory_space<vmem>>, vector<64x128xf32>
    tpu.vector_store %arg4[%c0_5, %c0_6], %6 {strides = array<i32>} : memref<64x128xf32, #tpu.memory_space<vmem>>, vector<64x128xf32>,
    return
  }
  func.func @transform_0(%arg0: i32) -> (i32, i32) {
    %c0_i32 = arith.constant 0 : i32
    %c0_i32_0 = arith.constant 0 : i32
    %c0_i32_1 = arith.constant 0 : i32
    return %c0_i32, %c0_i32_0 : i32, i32
  }
  func.func @transform_1(%arg0: i32) -> (i32, i32) {
    %c0_i32 = arith.constant 0 : i32
    %c0_i32_0 = arith.constant 0 : i32
    return %c0_i32, %arg0 : i32, i32
  }
  func.func @transform_2(%arg0: i32) -> (i32, i32) {
    %c0_i32 = arith.constant 0 : i32
    %c0_i32_0 = arith.constant 0 : i32
    %c0_i32_1 = arith.constant 0 : i32
    return %c0_i32, %c0_i32_0 : i32, i32
  }
  func.func @transform_3(%arg0: i32) -> (i32, i32) {
    %c0_i32 = arith.constant 0 : i32
    %c0_i32_0 = arith.constant 0 : i32
    return %c0_i32, %arg0 : i32, i32
  }
}

</mosaic_0001>

<llo_original>
// kernel: tpu_custom_call.1
$region0: #{tpu_custom_call.1}
  #allocation0 [shape = 'u32[]', space=smem, size = 0x4, offset = 0x4, fixed_abs, tag = 'smem constant byte address 0x4 - core index']
  #allocation1 [shape = 'u32[144,128]{1,0:T(1,128)}', space=vmem, size = 0x12000, scoped, tag = 'internal scratch']
  %s0 = inlined_call_operand.vmem [shape: bf16[64,32], index: 0, kind: input, shape index: {}]
  %s1 = inlined_call_operand.vmem [shape: f32[32,256], index: 1, kind: input, shape index: {}]
  %s2 = inlined_call_operand.vmem [shape: f32[64,1], index: 2, kind: input, shape index: {}]
  %s3 = inlined_call_operand.hbm [shape: f32[64,256], index: 3, kind: output, shape index: {}]
  %s4 = sld [smem:[#allocation0]]
  $region83: #{tpu_custom_call.1} parent=0
    _
  %s6 = ssub.s32 1, %s4
  %s7 = scalar_select 0, %s6, %s4
  $region1: #{tpu_custom_call.1} parent=0
    #allocation2 [shape = 'u8[32768]{0}', space=vmem, size = 0x8000, scoped, tag = 'input window, operand 1']
    #allocation3 [shape = 'u8[65536]{0}', space=vmem, size = 0x10000, scoped, tag = 'output window, operand 0']
    #allocation4 [shape = 's32[2]{0}', space=sflag, size = 0x8, scoped, tag = 'scoped memory for tpu_custom_call.1']
    %8 = vsyncpa [#allocation4], 0
    %s9 = scalar_lea.sflag [#allocation4], 1
    %10 = vsyncpa %s9, 0
    loop: start=0, step=1, limit=4
    $region2: #{tpu_custom_call.1} parent=1 // loop_pre_header
      _
    $region3: #{tpu_custom_call.1} parent=1 // loop_header
      %s12 = sphi 0, %s16
      %p13 = scmp.ge.s32.totalorder %s12, 4
      %s20 = sphi 0, %s20
      %s22 = sphi 0, %s20
      %s23 = sphi 0, %s22
      %s37 = sphi 0, %s23
      %s43 = sphi 0, %s45
      %s46 = sphi 0, %s43
      %s47 = sphi 0, %s46
      %s63 = sphi 0, %s47
      %s67 = sphi 0, %s67
      %s69 = sphi 0, %s67
      %s70 = sphi 0, %s69
      %s84 = sphi 0, %s70
      %s90 = sphi 0, %s92
      %s93 = sphi 0, %s90
      %s94 = sphi 0, %s93
      %s110 = sphi 0, %s94
    $region4: #{tpu_custom_call.1} parent=1 // loop_header_branch
      %15 = sbr.rel (%p13) target = $region8
    $region5: #{tpu_custom_call.1} parent=1 // loop_body
      %s17 = ssub.s32 %s12, 1
      %s18 = ssub.s32 %s12, 2
      %s19 = sadd.s32 %s12, 1
      %s21 = sadd.s32 %s20, 1
      %p24 = scmp.eq.s32.totalorder %s12, 1
      %p25 = scmp.ne.s32.totalorder %s20, %s22
      %p26 = scmp.eq.s32.totalorder %s12, 0
      %p27 = por %p25, %p26
      %p28 = scmp.ne.s32.totalorder %s20, %s22
      %p29 = scmp.eq.s32.totalorder %s17, 1
      %p30 = por %p28, %p29
      %p31 = scmp.ne.s32.totalorder %s22, %s23
      %p32 = scmp.eq.s32.totalorder %s17, 0
      %p33 = por %p31, %p32
      %p34 = scmp.ne.s32.totalorder %s22, %s23
      %p35 = scmp.eq.s32.totalorder %s18, 1
      %p36 = por %p34, %p35
      %p38 = scmp.ne.s32.totalorder %s23, %s37
      %p39 = scmp.eq.s32.totalorder %s18, 0
      %p40 = por %p38, %p39
      %s41 = ssub.s32 %s12, %s19
      %p42 = scmp.eq.s32.totalorder %s41, 0
      %s44 = sadd.s32 %s43, 1
      %s45 = scalar_select %p42, %s43, %s44
      %p48 = pneg %p42
      %p49 = scmp.eq.s32.totalorder %s12, 1
      %p50 = por %p48, %p49
      %p51 = scmp.ne.s32.totalorder %s43, %s46
      %p52 = scmp.eq.s32.totalorder %s12, 0
      %p53 = por %p51, %p52
      %p54 = scmp.ne.s32.totalorder %s43, %s46
      %p55 = scmp.eq.s32.totalorder %s17, 1
      %p56 = por %p54, %p55
      %p57 = scmp.ne.s32.totalorder %s46, %s47
      %p58 = scmp.eq.s32.totalorder %s17, 0
      %p59 = por %p57, %p58
      %p60 = scmp.ne.s32.totalorder %s46, %s47
      %p61 = scmp.eq.s32.totalorder %s18, 1
      %p62 = por %p60, %p61
      %p64 = scmp.ne.s32.totalorder %s47, %s63
      %p65 = scmp.eq.s32.totalorder %s18, 0
      %p66 = por %p64, %p65
      %s68 = sadd.s32 %s67, 1
      %p71 = scmp.eq.s32.totalorder %s12, 1
      %p72 = scmp.ne.s32.totalorder %s67, %s69
      %p73 = scmp.eq.s32.totalorder %s12, 0
      %p74 = por %p72, %p73
      %p75 = scmp.ne.s32.totalorder %s67, %s69
      %p76 = scmp.eq.s32.totalorder %s17, 1
      %p77 = por %p75, %p76
      %p78 = scmp.ne.s32.totalorder %s69, %s70
      %p79 = scmp.eq.s32.totalorder %s17, 0
      %p80 = por %p78, %p79
      %p81 = scmp.ne.s32.totalorder %s69, %s70
      %p82 = scmp.eq.s32.totalorder %s18, 1
      %p83 = por %p81, %p82
      %p85 = scmp.ne.s32.totalorder %s70, %s84
      %p86 = scmp.eq.s32.totalorder %s18, 0
      %p87 = por %p85, %p86
      %s88 = ssub.s32 %s12, %s19
      %p89 = scmp.eq.s32.totalorder %s88, 0
      %s91 = sadd.s32 %s90, 1
      %s92 = scalar_select %p89, %s90, %s91
      %p95 = pneg %p89
      %p96 = scmp.eq.s32.totalorder %s12, 1
      %p97 = por %p95, %p96
      %p98 = scmp.ne.s32.totalorder %s90, %s93
      %p99 = scmp.eq.s32.totalorder %s12, 0
      %p100 = por %p98, %p99
      %p101 = scmp.ne.s32.totalorder %s90, %s93
      %p102 = scmp.eq.s32.totalorder %s17, 1
      %p103 = por %p101, %p102
      %p104 = scmp.ne.s32.totalorder %s93, %s94
      %p105 = scmp.eq.s32.totalorder %s17, 0
      %p106 = por %p104, %p105
      %p107 = scmp.ne.s32.totalorder %s93, %s94
      %p108 = scmp.eq.s32.totalorder %s18, 1
      %p109 = por %p107, %p108
      %p111 = scmp.ne.s32.totalorder %s94, %s110
      %p112 = scmp.eq.s32.totalorder %s18, 0
      %p113 = por %p111, %p112
      %p114 = scmp.le.s32.totalorder 1, %s12
      %p115 = scmp.lt.s32.totalorder %s12, 3
      %p116 = pnand %p114, %p115
      %p117 = pneg %p116
      // Predicated region
      $region9: #{tpu_custom_call.1} parent=5 // pred_check
        _
      $region10: #{tpu_custom_call.1} parent=5 // pred_check_branch
        %119 = sbr.rel (%p116) target = $region12
      $region11: #{tpu_custom_call.1} parent=5 // pred_region
        %s120 = ssub.s32 %s12, 1
        // Predicated region
        $region13: #{tpu_custom_call.1} parent=11 // pred_check
          %p121 = pneg %p33
        $region14: #{tpu_custom_call.1} parent=11 // pred_check_branch
          %123 = sbr.rel (%p121) target = $region16
        $region15: #{tpu_custom_call.1} parent=11 // pred_region
          _
        $region16: #{tpu_custom_call.1} parent=11 // pred_fallthru
          _
        // Predicated region
        $region17: #{tpu_custom_call.1} parent=11 // pred_check
          %p124 = pneg %p80
        $region18: #{tpu_custom_call.1} parent=11 // pred_check_branch
          %126 = sbr.rel (%p124) target = $region20
        $region19: #{tpu_custom_call.1} parent=11 // pred_region
          _
        $region20: #{tpu_custom_call.1} parent=11 // pred_fallthru
          _
      $region12: #{tpu_custom_call.1} parent=5 // pred_fallthru
        _
      %p127 = scmp.lt.s32.totalorder %s12, 2
      // Predicated region
      $region21: #{tpu_custom_call.1} parent=5 // pred_check
        %p128 = pneg %p127
      $region22: #{tpu_custom_call.1} parent=5 // pred_check_branch
        %130 = sbr.rel (%p128) target = $region24
      $region23: #{tpu_custom_call.1} parent=5 // pred_region
        // Predicated region
        $region25: #{tpu_custom_call.1} parent=23 // pred_check
          %p131 = pneg %p53
        $region26: #{tpu_custom_call.1} parent=23 // pred_check_branch
          %133 = sbr.rel (%p131) target = $region28
        $region27: #{tpu_custom_call.1} parent=23 // pred_region
          %s134 = sand.u32 %s43, 1
          %s135 = sand.u32 %s43, 1
          %s136 = smul.addr %s135, 32
          %s137 = scalar_lea.vmem [#allocation2], %s136
          %s138 = smul.addr %s12, 8
          %s139 = scalar_lea.vmem %s1, %s138
          // Predicated region
          $region29: #{tpu_custom_call.1} parent=27 // pred_check
            _
          $region30: #{tpu_custom_call.1} parent=27 // pred_check_branch
            %141 = sbr.rel (0) target = $region32
          $region31: #{tpu_custom_call.1} parent=27 // pred_region
            // Predicated region
            $region33: #{tpu_custom_call.1} parent=31 // pred_check
              _
            $region34: #{tpu_custom_call.1} parent=31 // pred_check_branch
              %143 = sbr.rel (0) target = $region36
            $region35: #{tpu_custom_call.1} parent=31 // pred_region
              // Predicated region
              $region48: #{tpu_custom_call.1} parent=35 // pred_check
                _
              $region49: #{tpu_custom_call.1} parent=35 // pred_check_branch
                %164 = sbr.rel (0) target = $region51
              $region50: #{tpu_custom_call.1} parent=35 // pred_region
                loop: start=0, step=1, limit=1
                $region52: #{tpu_custom_call.1} parent=50 // loop_pre_header
                  _
                $region53: #{tpu_custom_call.1} parent=50 // loop_header
                  %s166 = sphi 0, %s170
                  %p167 = scmp.ge.s32.totalorder %s166, 1
                  %s171 = sphi %s139, %s139
                  %s172 = sphi %s137, %s137
                $region54: #{tpu_custom_call.1} parent=50 // loop_header_branch
                  %169 = sbr.rel (%p167) target = $region58
                $region55: #{tpu_custom_call.1} parent=50 // loop_body
                  %v173 = vld [vmem:[%s171] sm:$0xff]
                  %174 = vst [vmem:[%s172] sm:$0xff] %v173
                  %v175 = vld [vmem:[%s171 + $0x10] sm:$0xff]
                  %176 = vst [vmem:[%s172 + $0x8] sm:$0xff] %v175
                  %v177 = vld [vmem:[%s171 + $0x20] sm:$0xff]
                  %178 = vst [vmem:[%s172 + $0x10] sm:$0xff] %v177
                  %v179 = vld [vmem:[%s171 + $0x30] sm:$0xff]
                  %180 = vst [vmem:[%s172 + $0x18] sm:$0xff] %v179
                $region56: #{tpu_custom_call.1} parent=50 // loop_footer
                  %s170 = sadd.s32 1, %s166
                $region57: #{tpu_custom_call.1} parent=50 // loop_footer_branch
                  %165 = sbr.rel target = $region53
                $region58: #{tpu_custom_call.1} parent=50 // loop_exit
                  _
              $region51: #{tpu_custom_call.1} parent=35 // pred_fallthru
                _
              // Predicated region
              $region59: #{tpu_custom_call.1} parent=35 // pred_check
                _
              $region60: #{tpu_custom_call.1} parent=35 // pred_check_branch
                %182 = sbr.rel target = $region62
              $region61: #{tpu_custom_call.1} parent=35 // pred_region
                _
              $region62: #{tpu_custom_call.1} parent=35 // pred_fallthru
                _
            $region36: #{tpu_custom_call.1} parent=31 // pred_fallthru
              _
            // Predicated region
            $region37: #{tpu_custom_call.1} parent=31 // pred_check
              _
            $region38: #{tpu_custom_call.1} parent=31 // pred_check_branch
              %145 = sbr.rel target = $region40
            $region39: #{tpu_custom_call.1} parent=31 // pred_region
              loop: start=0, step=1, limit=1
              $region41: #{tpu_custom_call.1} parent=39 // loop_pre_header
                _
              $region42: #{tpu_custom_call.1} parent=39 // loop_header
                %s148 = sphi 0, %s152
                %p149 = scmp.ge.s32.totalorder %s148, 1
                %s153 = sphi %s139, %s139
                %s154 = sphi %s137, %s137
              $region43: #{tpu_custom_call.1} parent=39 // loop_header_branch
                %151 = sbr.rel (%p149) target = $region47
              $region44: #{tpu_custom_call.1} parent=39 // loop_body
                %v155 = vld [vmem:[%s153] sm:$0xff]
                %156 = vst [vmem:[%s154] sm:$0xff] %v155
                %v157 = vld [vmem:[%s153 + $0x10] sm:$0xff]
                %158 = vst [vmem:[%s154 + $0x8] sm:$0xff] %v157
                %v159 = vld [vmem:[%s153 + $0x20] sm:$0xff]
                %160 = vst [vmem:[%s154 + $0x10] sm:$0xff] %v159
                %v161 = vld [vmem:[%s153 + $0x30] sm:$0xff]
                %162 = vst [vmem:[%s154 + $0x18] sm:$0xff] %v161
              $region45: #{tpu_custom_call.1} parent=39 // loop_footer
                %s152 = sadd.s32 1, %s148
              $region46: #{tpu_custom_call.1} parent=39 // loop_footer_branch
                %147 = sbr.rel target = $region42
              $region47: #{tpu_custom_call.1} parent=39 // loop_exit
                _
            $region40: #{tpu_custom_call.1} parent=31 // pred_fallthru
              _
          $region32: #{tpu_custom_call.1} parent=27 // pred_fallthru
            _
          %183 = vnop
        $region28: #{tpu_custom_call.1} parent=23 // pred_fallthru
          _
      $region24: #{tpu_custom_call.1} parent=5 // pred_fallthru
        _
      %p184 = scmp.le.s32.totalorder 1, %s12
      %p185 = scmp.lt.s32.totalorder %s12, 3
      %p186 = pnand %p184, %p185
      %p187 = pneg %p186
      // Predicated region
      $region63: #{tpu_custom_call.1} parent=5 // pred_check
        _
      $region64: #{tpu_custom_call.1} parent=5 // pred_check_branch
        %189 = sbr.rel (%p186) target = $region66
      $region65: #{tpu_custom_call.1} parent=5 // pred_region
        %s190 = ssub.s32 %s12, 1
        %s191 = sand.u32 %s46, 1
        %s192 = sand.u32 %s46, 1
        %s193 = smul.addr %s192, 32
        %s194 = scalar_lea.vmem [#allocation2], %s193
        // Predicated region
        $region67: #{tpu_custom_call.1} parent=65 // pred_check
          %p195 = pneg %p59
        $region68: #{tpu_custom_call.1} parent=65 // pred_check_branch
          %197 = sbr.rel (%p195) target = $region70
        $region69: #{tpu_custom_call.1} parent=65 // pred_region
          _
        $region70: #{tpu_custom_call.1} parent=65 // pred_fallthru
          _
        %p198 = pneg %p33
        %p199 = pneg %p30
        %s200 = sand.u32 %s46, 1
        %s201 = sand.u32 %s46, 1
        %s202 = smul.addr %s201, 32
        %s203 = scalar_lea.vmem [#allocation2], %s202
        %p204 = pneg %p59
        %p205 = pneg %p56
        %p206 = pneg %p80
        %p207 = pneg %p77
        %p208 = pneg %p106
        %p209 = pneg %p103
        %s210 = sand.u32 %s93, 1
        %s211 = scalar_lea.sflag [#allocation4], %s210
        %s212 = sand.u32 %s93, 1
        %s213 = smul.addr %s212, 64
        %s214 = scalar_lea.vmem [#allocation3], %s213
        %v216 = vld [vmem:[%s0] sm:$0xf]
        %v217 = vld [vmem:[%s0 + $0x4] sm:$0xf]
        %v218 = vld [vmem:[%s0 + $0x8] sm:$0xf]
        %v219 = vld [vmem:[%s0 + $0xc] sm:$0xf]
        %v220 = vld [vmem:[%s0 + $0x10] sm:$0xf]
        %v221 = vld [vmem:[%s0 + $0x14] sm:$0xf]
        %v222 = vld [vmem:[%s0 + $0x18] sm:$0xf]
        %v223 = vld [vmem:[%s0 + $0x1c] sm:$0xf]
        %v224 = vld [vmem:[%s194] sm:$0xff]
        %v225 = vld [vmem:[%s194 + $0x8] sm:$0xff]
        %v226 = vld [vmem:[%s194 + $0x10] sm:$0xff]
        %v227 = vld [vmem:[%s194 + $0x18] sm:$0xff]
        %v228 = vpack.c.bf16 %v225, %v224
        %v229 = vpack.c.bf16 %v227, %v226
        %v230 = vld [vmem:[%s2] sm:$0xff]
        %v231 = vld [vmem:[%s2 + $0x8] sm:$0xff]
        %v232 = vld [vmem:[%s2 + $0x10] sm:$0xff]
        %v233 = vld [vmem:[%s2 + $0x18] sm:$0xff]
        %v234 = vld [vmem:[%s2 + $0x20] sm:$0xff]
        %v235 = vld [vmem:[%s2 + $0x28] sm:$0xff]
        %v236 = vld [vmem:[%s2 + $0x30] sm:$0xff]
        %v237 = vld [vmem:[%s2 + $0x38] sm:$0xff]
        %239 = vset.pattern.permute.xlu0 0
        %240 = vperm.xlu0 %239, %v230
        %v241 = vpop.permute.xlu0 %240
        %244 = vset.pattern.permute.xlu0 0
        %245 = vperm.xlu0 %244, %v231
        %v246 = vpop.permute.xlu0 %245
        %249 = vset.pattern.permute.xlu0 0
        %250 = vperm.xlu0 %249, %v232
        %v251 = vpop.permute.xlu0 %250
        %254 = vset.pattern.permute.xlu0 0
        %255 = vperm.xlu0 %254, %v233
        %v256 = vpop.permute.xlu0 %255
        %259 = vset.pattern.permute.xlu0 0
        %260 = vperm.xlu0 %259, %v234
        %v261 = vpop.permute.xlu0 %260
        %264 = vset.pattern.permute.xlu0 0
        %265 = vperm.xlu0 %264, %v235
        %v266 = vpop.permute.xlu0 %265
        %269 = vset.pattern.permute.xlu0 0
        %270 = vperm.xlu0 %269, %v236
        %v271 = vpop.permute.xlu0 %270
        %274 = vset.pattern.permute.xlu0 0
        %275 = vperm.xlu0 %274, %v237
        %v276 = vpop.permute.xlu0 %275
        %v286 = vunpack.c.l.b16 %v216
        %v287 = vunpack.c.l.b16 %v217
        %v288 = vunpack.c.l.b16 %v218
        %v289 = vunpack.c.l.b16 %v219
        %v290 = vunpack.c.l.b16 %v220
        %v291 = vunpack.c.l.b16 %v221
        %v292 = vunpack.c.l.b16 %v222
        %v293 = vunpack.c.l.b16 %v223
        %v294 = vpack.c.b16 %v287, %v286
        %v295 = vpack.c.b16 %v289, %v288
        %v296 = vpack.c.b16 %v291, %v290
        %v297 = vpack.c.b16 %v293, %v292
        %vm298 = vcmask 261120
        %v300 = vsel %vm298, %v294, 0
        %v303 = vsel %vm298, %v295, 0
        %v306 = vsel %vm298, %v296, 0
        %v309 = vsel %vm298, %v297, 0
        %311 = vmatprep.subr.bf16.mxu0 0
        %312 = vmatpush1.bf16.msra.mxu0 %v228
        %313 = vmatprep.subr.bf16.mxu0 0
        %314 = vmatpush1.bf16.msra.mxu0 %v229
        %315 = vmatprep.subr.bf16.mxu0 0
        %316 = vmatpush1.bf16.msra.mxu0 0
        %317 = vmatprep.subr.bf16.mxu0 0
        %318 = vmatpush1.bf16.msra.mxu0 0
        %319 = vmatprep.subr.bf16.mxu0 0
        %320 = vmatpush1.bf16.msra.mxu0 0
        %321 = vmatprep.subr.bf16.mxu0 0
        %322 = vmatpush1.bf16.msra.mxu0 0
        %323 = vmatprep.subr.bf16.mxu0 0
        %324 = vmatpush1.bf16.msra.mxu0 0
        %325 = vmatprep.subr.bf16.mxu0 0
        %326 = vmatpush1.bf16.msra.mxu0 0
        %327 = vmatprep.subr.bf16.mxu0 0
        %328 = vmatpush1.bf16.msra.mxu0 0
        %329 = vmatprep.subr.bf16.mxu0 0
        %330 = vmatpush1.bf16.msra.mxu0 0
        %331 = vmatprep.subr.bf16.mxu0 0
        %332 = vmatpush1.bf16.msra.mxu0 0
        %333 = vmatprep.subr.bf16.mxu0 0
        %334 = vmatpush1.bf16.msra.mxu0 0
        %335 = vmatprep.subr.bf16.mxu0 0
        %336 = vmatpush1.bf16.msra.mxu0 0
        %337 = vmatprep.subr.bf16.mxu0 0
        %338 = vmatpush1.bf16.msra.mxu0 0
        %339 = vmatprep.subr.bf16.mxu0 0
        %340 = vmatpush1.bf16.msra.mxu0 0
        %341 = vmatprep.subr.bf16.mxu0 0
        %342 = vmatpush1.bf16.msra.mxu0 0
        %343 = vmatprep.mubr.bf16.mxu0 0
        %344 = vmatmul.mubr.bf16.gmra.mrb[0].mxu0 %v300
        %v345 = vpop.f32.mrb[0].mxu0
        %v346 = vadd.f32 %v241, %v345
        %v347 = vpop.f32.mrb[0].mxu0
        %v348 = vpop.f32.mrb[0].mxu0
        %v349 = vadd.f32 %v246, %v348
        %v350 = vpop.f32.mrb[0].mxu0
        %351 = vmatprep.mubr.bf16.mxu0 0
        %352 = vmatmul.mubr.bf16.gmra.mrb[0].mxu0 %v303
        %v353 = vpop.f32.mrb[0].mxu0
        %v354 = vadd.f32 %v251, %v353
        %v355 = vpop.f32.mrb[0].mxu0
        %v356 = vpop.f32.mrb[0].mxu0
        %v357 = vadd.f32 %v256, %v356
        %v358 = vpop.f32.mrb[0].mxu0
        %359 = vmatprep.mubr.bf16.mxu0 0
        %360 = vmatmul.mubr.bf16.gmra.mrb[0].mxu0 %v306
        %v361 = vpop.f32.mrb[0].mxu0
        %v362 = vadd.f32 %v261, %v361
        %v363 = vpop.f32.mrb[0].mxu0
        %v364 = vpop.f32.mrb[0].mxu0
        %v365 = vadd.f32 %v266, %v364
        %v366 = vpop.f32.mrb[0].mxu0
        %367 = vmatprep.mubr.bf16.mxu0 0
        %368 = vmatmul.mubr.bf16.gmra.mrb[0].mxu0 %v309
        %v369 = vpop.f32.mrb[0].mxu0
        %v370 = vadd.f32 %v271, %v369
        %v371 = vpop.f32.mrb[0].mxu0
        %v372 = vpop.f32.mrb[0].mxu0
        %v373 = vadd.f32 %v276, %v372
        %v374 = vpop.f32.mrb[0].mxu0
        %375 = vdwg.mxu0
        %376 = vst [vmem:[%s214] sm:$0xff] %v346
        %377 = vst [vmem:[%s214 + $0x8] sm:$0xff] %v349
        %378 = vst [vmem:[%s214 + $0x10] sm:$0xff] %v354
        %379 = vst [vmem:[%s214 + $0x18] sm:$0xff] %v357
        %380 = vst [vmem:[%s214 + $0x20] sm:$0xff] %v362
        %381 = vst [vmem:[%s214 + $0x28] sm:$0xff] %v365
        %382 = vst [vmem:[%s214 + $0x30] sm:$0xff] %v370
        %383 = vst [vmem:[%s214 + $0x38] sm:$0xff] %v373
        %s384 = sand.u32 %s93, 1
        %s385 = scalar_lea.sflag [#allocation4], %s384
        %s386 = sand.u32 %s93, 1
        %s387 = smul.addr %s386, 64
        %s388 = scalar_lea.vmem [#allocation3], %s387
        // Predicated region
        $region71: #{tpu_custom_call.1} parent=65 // pred_check
          %p389 = pneg %p103
        $region72: #{tpu_custom_call.1} parent=65 // pred_check_branch
          %391 = sbr.rel (%p389) target = $region74
        $region73: #{tpu_custom_call.1} parent=65 // pred_region
          %s393 = ssub.s32 1024, 1024
          %394 = vsyncadd %s385, %s393
          %s395 = smul.addr %s17, 128
          %s396 = scalar_lea.hbm %s3, %s395
          %s397 = sshll.u32 %s388, 4
          %s398 = int_to_ptr.vmem [resolvable:$true] %s397
          %403 = dma.vmem_to_hbm [thread:$0]  %s398, 1024, %s396, %s385, 128, 256, 8
        $region74: #{tpu_custom_call.1} parent=65 // pred_fallthru
          _
      $region66: #{tpu_custom_call.1} parent=5 // pred_fallthru
        _
      %p404 = scmp.le.s32.totalorder 2, %s12
      // Predicated region
      $region75: #{tpu_custom_call.1} parent=5 // pred_check
        %p405 = pneg %p404
      $region76: #{tpu_custom_call.1} parent=5 // pred_check_branch
        %407 = sbr.rel (%p405) target = $region78
      $region77: #{tpu_custom_call.1} parent=5 // pred_region
        %s408 = ssub.s32 %s12, 2
        // Predicated region
        $region79: #{tpu_custom_call.1} parent=77 // pred_check
          %p409 = pneg %p109
        $region80: #{tpu_custom_call.1} parent=77 // pred_check_branch
          %411 = sbr.rel (%p409) target = $region82
        $region81: #{tpu_custom_call.1} parent=77 // pred_region
          %s412 = sand.u32 %s94, 1
          %s413 = scalar_lea.sflag [#allocation4], %s412
          %s414 = sand.u32 %s94, 1
          %s415 = smul.addr %s414, 64
          %s416 = scalar_lea.vmem [#allocation3], %s415
          %417 = dma.done %s413, 1024
        $region82: #{tpu_custom_call.1} parent=77 // pred_fallthru
          _
      $region78: #{tpu_custom_call.1} parent=5 // pred_fallthru
        _
    $region6: #{tpu_custom_call.1} parent=1 // loop_footer
      %s16 = sadd.s32 1, %s12
    $region7: #{tpu_custom_call.1} parent=1 // loop_footer_branch
      %11 = sbr.rel target = $region3
    $region8: #{tpu_custom_call.1} parent=1 // loop_exit
      _
    %418 = vsyncpa [#allocation4], 1
    %s419 = scalar_lea.sflag [#allocation4], 1
    %420 = vsyncpa %s419, 1

</llo_original>
